<compile_context>
chip_gen: v5e
topology: v5e:2x2
jax: 0.10.0
libtpu: 0.0.40
codegen_flags: <defaults>
</compile_context>

<pallas_src>
import jax
import jax.numpy as jnp
from jax import lax
from jax.experimental import pallas as pl
from jax.experimental.pallas import tpu as pltpu

N_GATES = 4


def _dndlstm_recurrence_kernel(preact_x_ref, m_seq_ref, h0_ref, c0_ref,
                               whT_ref, out_ref):
    """Serial LSTM+DND-readout recurrence. Everything h-independent
    (i2h preactivation, DND retrieval, A2C head) is hoisted to the wrapper."""
    H = h0_ref.shape[-1]
    T = preact_x_ref.shape[0]
    out_w = out_ref.shape[-1]
    pad = out_w - (2 + N_GATES) * H
    pad_row = jnp.zeros((1, pad), jnp.float32) if pad else None  # hoisted

    def step(t, carry):
        h, c = carry                                              # (1, H) each
        # Recurrent half of the pre-activation; i2h(x_t)+bi+bh is precomputed.
        preact = preact_x_ref[pl.ds(t, 1), :] + jnp.dot(
            h, whT_ref[...], preferred_element_type=jnp.float32)  # (1, 5H)
        gates = jax.nn.sigmoid(preact[:, :N_GATES * H])           # (1, 4H)=f|i|o|r
        f_t = gates[:, 0 * H:1 * H]
        i_t = gates[:, 1 * H:2 * H]
        o_t = gates[:, 2 * H:3 * H]
        r_t = gates[:, 3 * H:4 * H]
        c_new = jnp.tanh(preact[:, N_GATES * H:])
        m_t = m_seq_ref[pl.ds(t, 1), :]      # tanh(DND 1-NN value), precomputed
        c_t = f_t * c + i_t * c_new + r_t * m_t
        h_t = o_t * jnp.tanh(c_t)
        # Single lane-dense row: [h | c | f i o r | pad] -> one unmasked store.
        pieces = [h_t, c_t, gates]
        if pad_row is not None:
            pieces.append(pad_row)
        out_ref[pl.ds(t, 1), :] = jnp.concatenate(pieces, axis=-1)
        return (h_t, c_t)

    unroll = True if T <= 16 else 8
    lax.fori_loop(0, T, step, (h0_ref[...], c0_ref[...]), unroll=unroll)


def prepare_params(params):
    """One-time layout prep: nn.Linear (out,in) weights -> [in,out], fold
    bi+bh, fuse actor|critic output heads into a single matrix."""
    (wi, bi, wh, bh, wih, bih, wa, ba, wc, bc) = params
    return dict(
        wiT=wi.T,
        b_ih=(bi + bh)[None, :],                       # folded bias, (1, 5H)
        whT=wh.T,
        wihT=wih.T,
        bih=bih[None, :],
        wacT=jnp.concatenate([wa, wc], axis=0).T,      # (A2C, A+1) actor|critic
        bac=jnp.concatenate([ba, bc], axis=0)[None, :],
    )


def dndlstm_rollout(x_seq, q_seq, h0, c0, p, dnd_keys, dnd_vals):
    """T DNDLSTM forward steps with a fixed DND; recurrence in one kernel."""
    T = x_seq.shape[0]
    H = h0.shape[-1]
    A = p["wacT"].shape[-1] - 1
    f32 = jnp.float32

    # ---- rollout-wide precompute (independent of h): batched MXU work ----
    preact_x = (x_seq @ p["wiT"] + p["b_ih"]).astype(f32)          # (T, 5H)

    # DND.get_memory_non_embedder with a fixed dict: cosine 1-NN + gather.
    kn = dnd_keys / jnp.maximum(
        jnp.linalg.norm(dnd_keys, axis=-1, keepdims=True), 1e-8)
    qn = q_seq / jnp.maximum(
        jnp.linalg.norm(q_seq, axis=-1, keepdims=True), 1e-8)
    sims = (qn @ kn.T).astype(f32)                                  # (T, L)
    best_idx = jnp.argmax(sims, axis=-1)                            # (T,) int
    m_seq = jnp.tanh(dnd_vals[best_idx]).astype(f32)                # (T, H)

    out_w = int(pl.cdiv((2 + N_GATES) * H, 128)) * 128

    # Single grid step: all operands fully resident in VMEM (one DMA each),
    # time loop unrolled inside the kernel. VMEM limits are irrelevant at
    # these sizes; chunk T / raise vmem_limit_bytes only for huge rollouts.
    slab = pl.pallas_call(
        _dndlstm_recurrence_kernel,
        out_shape=jax.ShapeDtypeStruct((T, out_w), f32),
        in_specs=[pl.BlockSpec(memory_space=pltpu.MemorySpace.VMEM)] * 5,
        out_specs=pl.BlockSpec(memory_space=pltpu.MemorySpace.VMEM),
    )(preact_x, m_seq, h0, c0, p["whT"])

    h_seq = slab[:, 0:H]
    c_seq = slab[:, 1 * H:2 * H]
    f_seq = slab[:, 2 * H:3 * H]
    i_seq = slab[:, 3 * H:4 * H]
    o_seq = slab[:, 4 * H:5 * H]
    r_seq = slab[:, 5 * H:6 * H]

    # ---- A2C head, hoisted off the recurrence: batched over all T steps ----
    a2c_h = jnp.maximum(h_seq @ p["wihT"] + p["bih"], 0.0)          # (T, A2C)
    logits_v = a2c_h @ p["wacT"] + p["bac"]                         # (T, A+1)
    logits = logits_v[:, :A]
    v = logits_v[:, A:A + 1]
    log_pi = jax.nn.log_softmax(logits, axis=-1)                    # exact
    pi = jnp.exp(log_pi)
    entropy = -jnp.sum(pi * log_pi, axis=-1, keepdims=True)

    return dict(h=h_seq, c=c_seq, f=f_seq, i=i_seq, o=o_seq, r=r_seq,
                m=m_seq, pi=pi, log_pi=log_pi, v=v, entropy=entropy,
                best_idx=best_idx)


def init_params(key, dim_in, dim_hid, dim_a2c, dim_out):
    ks = jax.random.split(key, 10)
    s = 0.1
    wi = jax.random.normal(ks[0], ((N_GATES + 1) * dim_hid, dim_in), jnp.float32) * s
    bi = jnp.zeros(((N_GATES + 1) * dim_hid,), jnp.float32)
    wh = jax.random.normal(ks[1], ((N_GATES + 1) * dim_hid, dim_hid), jnp.float32) * s
    bh = jnp.zeros(((N_GATES + 1) * dim_hid,), jnp.float32)
    wih = jax.random.normal(ks[2], (dim_a2c, dim_hid), jnp.float32) * s
    bih = jnp.zeros((dim_a2c,), jnp.float32)
    wa = jax.random.normal(ks[3], (dim_out, dim_a2c), jnp.float32) * s
    ba = jnp.zeros((dim_out,), jnp.float32)
    wc = jax.random.normal(ks[4], (1, dim_a2c), jnp.float32) * s
    bc = jnp.zeros((1,), jnp.float32)
    return (wi, bi, wh, bh, wih, bih, wa, ba, wc, bc)


if __name__ == "__main__":
    # small, module-consistent shapes
    dim_input_lstm = 16     # obs + barcode + reward features
    dim_hidden_lstm = 32
    dim_hidden_a2c = 32
    dim_output_lstm = 4     # num arms
    dict_len = 8
    key_dim = 16            # barcode_tensor feature dim (mem_store='context')
    T = 8                   # rollout length (time loop lives inside the kernel)

    root = jax.random.PRNGKey(0)
    kp, kx, kq, kh, kc, kk, kv, ka = jax.random.split(root, 8)

    params = init_params(kp, dim_input_lstm, dim_hidden_lstm,
                         dim_hidden_a2c, dim_output_lstm)
    params_t = prepare_params(params)   # transposed / folded / fused once

    x_seq = jax.random.normal(kx, (T, dim_input_lstm), jnp.float32)   # obs_bar_reward
    q_seq = jax.random.normal(kq, (T, key_dim), jnp.float32)          # barcode_tensor
    h0 = jax.random.normal(kh, (1, dim_hidden_lstm), jnp.float32) * 0.1
    c0 = jax.random.normal(kc, (1, dim_hidden_lstm), jnp.float32) * 0.1
    dnd_keys = jax.random.normal(kk, (dict_len, key_dim), jnp.float32)          # stored q_t
    dnd_vals = jax.random.normal(kv, (dict_len, dim_hidden_lstm), jnp.float32)  # stored c_t

    outs = jax.jit(dndlstm_rollout)(x_seq, q_seq, h0, c0, params_t,
                                    dnd_keys, dnd_vals)
    outs = jax.block_until_ready(outs)

    # pick_action: Categorical sampling + log_prob, directly from log-probs
    a_t = jax.random.categorical(ka, outs["log_pi"], axis=-1)             # (T,)
    prob_a_t = jnp.take_along_axis(outs["log_pi"], a_t[:, None], axis=1)[:, 0]
    predicted_barcode_idx = outs["best_idx"].astype(jnp.int32)
    # TODO(synk): predicted_barcode is a Python string in the original DND; we
    #             return the 1-NN memory index instead.
    # TODO(synk): dnd.save_memory_non_embedder is a stateful Python-dict
    #             mutation each step; this rollout assumes a fixed DND.

    jax.block_until_ready((a_t, prob_a_t, predicted_barcode_idx))
    print("KERNEL_OK")
</pallas_src>

<mosaic_0001>
module attributes {stable_mosaic.version = 11 : i64} {
  func.func @_dndlstm_recurrence_kernel(%arg0: memref<8x160xf32, #tpu.memory_space<vmem>>, %arg1: memref<8x32xf32, #tpu.memory_space<vmem>>, %arg2: memref<1x32xf32, #tpu.memory_space<vmem>>, %arg3: memref<1x32xf32, #tpu.memory_space<vmem>>, %arg4: memref<32x160xf32, #tpu.memory_space<vmem>>, %arg5: memref<8x256xf32, #tpu.memory_space<vmem>>) attributes {dimension_semantics = [], scalar_prefetch = 0 : i64, scratch_operands = 0 : i64, tpu.core_type = #tpu.core_type<tc>} {
    %cst = arith.constant 0.000000e+00 : f32
    %0 = vector.broadcast %cst : f32 to vector<1x64xf32>
    %c0 = arith.constant 0 : index
    %c0_0 = arith.constant 0 : index
    %1 = vector.load %arg2[%c0, %c0_0] : memref<1x32xf32, #tpu.memory_space<vmem>>, vector<1x32xf32>
    %c0_1 = arith.constant 0 : index
    %c0_2 = arith.constant 0 : index
    %2 = vector.load %arg3[%c0_1, %c0_2] : memref<1x32xf32, #tpu.memory_space<vmem>>, vector<1x32xf32>
    %c0_i32 = arith.constant 0 : i32
    %3 = arith.index_cast %c0_i32 : i32 to index
    %c0_3 = arith.constant 0 : index
    %4 = vector.load %arg0[%3, %c0_3] : memref<8x160xf32, #tpu.memory_space<vmem>>, vector<1x160xf32>
    %c0_4 = arith.constant 0 : index
    %c0_5 = arith.constant 0 : index
    %5 = vector.load %arg4[%c0_4, %c0_5] : memref<32x160xf32, #tpu.memory_space<vmem>>, vector<32x160xf32>
    %cst_6 = arith.constant dense<0.000000e+00> : vector<1x160xf32>
    %6 = tpu.matmul %1, %5, %cst_6 {dimension_numbers = #tpu.dot_dimension_numbers<[1], [0], [0], [1], [0, 0, 1, 1], [], []>} : vector<1x32xf32>, vector<32x160xf32>, vector<1x160xf32> -> vector<1x160xf32>
    %7 = arith.addf %4, %6 : vector<1x160xf32>
    %8 = vector.extract_strided_slice %7 {offsets = [0, 0], sizes = [1, 128], strides = [1, 1]} : vector<1x160xf32> to vector<1x128xf32>
    %9 = arith.negf %8 : vector<1x128xf32>
    %10 = math.exp %9 : vector<1x128xf32>
    %cst_7 = arith.constant 1.000000e+00 : f32
    %11 = vector.broadcast %cst_7 : f32 to vector<1x128xf32>
    %12 = arith.addf %11, %10 : vector<1x128xf32>
    %13 = arith.divf %11, %12 : vector<1x128xf32>
    %14 = vector.extract_strided_slice %13 {offsets = [0, 0], sizes = [1, 32], strides = [1, 1]} : vector<1x128xf32> to vector<1x32xf32>
    %15 = vector.extract_strided_slice %13 {offsets = [0, 32], sizes = [1, 32], strides = [1, 1]} : vector<1x128xf32> to vector<1x32xf32>
    %16 = vector.extract_strided_slice %13 {offsets = [0, 64], sizes = [1, 32], strides = [1, 1]} : vector<1x128xf32> to vector<1x32xf32>
    %17 = vector.extract_strided_slice %13 {offsets = [0, 96], sizes = [1, 32], strides = [1, 1]} : vector<1x128xf32> to vector<1x32xf32>
    %18 = vector.extract_strided_slice %7 {offsets = [0, 128], sizes = [1, 32], strides = [1, 1]} : vector<1x160xf32> to vector<1x32xf32>
    %19 = math.tanh %18 : vector<1x32xf32>
    %20 = arith.index_cast %c0_i32 : i32 to index
    %c0_8 = arith.constant 0 : index
    %21 = vector.load %arg1[%20, %c0_8] : memref<8x32xf32, #tpu.memory_space<vmem>>, vector<1x32xf32>
    %22 = arith.mulf %14, %2 : vector<1x32xf32>
    %23 = arith.mulf %15, %19 : vector<1x32xf32>
    %24 = arith.addf %22, %23 : vector<1x32xf32>
    %25 = arith.mulf %17, %21 : vector<1x32xf32>
    %26 = arith.addf %24, %25 : vector<1x32xf32>
    %27 = math.tanh %26 : vector<1x32xf32>
    %28 = arith.mulf %16, %27 : vector<1x32xf32>
    %29 = tpu.concatenate %28, %26, %13, %0 in 1 : vector<1x32xf32>, vector<1x32xf32>, vector<1x128xf32>, vector<1x64xf32> -> vector<1x256xf32>
    %30 = arith.index_cast %c0_i32 : i32 to index
    %c0_9 = arith.constant 0 : index
    %31 = vector.load %arg5[%30, %c0_9] : memref<8x256xf32, #tpu.memory_space<vmem>>, vector<1x256xf32>
    tpu.vector_store %arg5[%30, %c0_9], %29 {strides = array<i32>} : memref<8x256xf32, #tpu.memory_space<vmem>>, vector<1x256xf32>,
    %c1_i32 = arith.constant 1 : i32
    %32 = arith.index_cast %c1_i32 : i32 to index
    %c0_10 = arith.constant 0 : index
    %33 = vector.load %arg0[%32, %c0_10] : memref<8x160xf32, #tpu.memory_space<vmem>>, vector<1x160xf32>
    %c0_11 = arith.constant 0 : index
    %c0_12 = arith.constant 0 : index
    %34 = vector.load %arg4[%c0_11, %c0_12] : memref<32x160xf32, #tpu.memory_space<vmem>>, vector<32x160xf32>
    %cst_13 = arith.constant dense<0.000000e+00> : vector<1x160xf32>
    %35 = tpu.matmul %28, %34, %cst_13 {dimension_numbers = #tpu.dot_dimension_numbers<[1], [0], [0], [1], [0, 0, 1, 1], [], []>} : vector<1x32xf32>, vector<32x160xf32>, vector<1x160xf32> -> vector<1x160xf32>
    %36 = arith.addf %33, %35 : vector<1x160xf32>
    %37 = vector.extract_strided_slice %36 {offsets = [0, 0], sizes = [1, 128], strides = [1, 1]} : vector<1x160xf32> to vector<1x128xf32>
    %38 = arith.negf %37 : vector<1x128xf32>
    %39 = math.exp %38 : vector<1x128xf32>
    %cst_14 = arith.constant 1.000000e+00 : f32
    %40 = vector.broadcast %cst_14 : f32 to vector<1x128xf32>
    %41 = arith.addf %40, %39 : vector<1x128xf32>
    %42 = arith.divf %40, %41 : vector<1x128xf32>
    %43 = vector.extract_strided_slice %42 {offsets = [0, 0], sizes = [1, 32], strides = [1, 1]} : vector<1x128xf32> to vector<1x32xf32>
    %44 = vector.extract_strided_slice %42 {offsets = [0, 32], sizes = [1, 32], strides = [1, 1]} : vector<1x128xf32> to vector<1x32xf32>
    %45 = vector.extract_strided_slice %42 {offsets = [0, 64], sizes = [1, 32], strides = [1, 1]} : vector<1x128xf32> to vector<1x32xf32>
    %46 = vector.extract_strided_slice %42 {offsets = [0, 96], sizes = [1, 32], strides = [1, 1]} : vector<1x128xf32> to vector<1x32xf32>
    %47 = vector.extract_strided_slice %36 {offsets = [0, 128], sizes = [1, 32], strides = [1, 1]} : vector<1x160xf32> to vector<1x32xf32>
    %48 = math.tanh %47 : vector<1x32xf32>
    %49 = arith.index_cast %c1_i32 : i32 to index
    %c0_15 = arith.constant 0 : index
    %50 = vector.load %arg1[%49, %c0_15] : memref<8x32xf32, #tpu.memory_space<vmem>>, vector<1x32xf32>
    %51 = arith.mulf %43, %26 : vector<1x32xf32>
    %52 = arith.mulf %44, %48 : vector<1x32xf32>
    %53 = arith.addf %51, %52 : vector<1x32xf32>
    %54 = arith.mulf %46, %50 : vector<1x32xf32>
    %55 = arith.addf %53, %54 : vector<1x32xf32>
    %56 = math.tanh %55 : vector<1x32xf32>
    %57 = arith.mulf %45, %56 : vector<1x32xf32>
    %58 = tpu.concatenate %57, %55, %42, %0 in 1 : vector<1x32xf32>, vector<1x32xf32>, vector<1x128xf32>, vector<1x64xf32> -> vector<1x256xf32>
    %59 = arith.index_cast %c1_i32 : i32 to index
    %c0_16 = arith.constant 0 : index
    %60 = vector.load %arg5[%59, %c0_16] : memref<8x256xf32, #tpu.memory_space<vmem>>, vector<1x256xf32>
    tpu.vector_store %arg5[%59, %c0_16], %58 {strides = array<i32>} : memref<8x256xf32, #tpu.memory_space<vmem>>, vector<1x256xf32>,
    %c2_i32 = arith.constant 2 : i32
    %61 = arith.index_cast %c2_i32 : i32 to index
    %c0_17 = arith.constant 0 : index
    %62 = vector.load %arg0[%61, %c0_17] : memref<8x160xf32, #tpu.memory_space<vmem>>, vector<1x160xf32>
    %c0_18 = arith.constant 0 : index
    %c0_19 = arith.constant 0 : index
    %63 = vector.load %arg4[%c0_18, %c0_19] : memref<32x160xf32, #tpu.memory_space<vmem>>, vector<32x160xf32>
    %cst_20 = arith.constant dense<0.000000e+00> : vector<1x160xf32>
    %64 = tpu.matmul %57, %63, %cst_20 {dimension_numbers = #tpu.dot_dimension_numbers<[1], [0], [0], [1], [0, 0, 1, 1], [], []>} : vector<1x32xf32>, vector<32x160xf32>, vector<1x160xf32> -> vector<1x160xf32>
    %65 = arith.addf %62, %64 : vector<1x160xf32>
    %66 = vector.extract_strided_slice %65 {offsets = [0, 0], sizes = [1, 128], strides = [1, 1]} : vector<1x160xf32> to vector<1x128xf32>
    %67 = arith.negf %66 : vector<1x128xf32>
    %68 = math.exp %67 : vector<1x128xf32>
    %cst_21 = arith.constant 1.000000e+00 : f32
    %69 = vector.broadcast %cst_21 : f32 to vector<1x128xf32>
    %70 = arith.addf %69, %68 : vector<1x128xf32>
    %71 = arith.divf %69, %70 : vector<1x128xf32>
    %72 = vector.extract_strided_slice %71 {offsets = [0, 0], sizes = [1, 32], strides = [1, 1]} : vector<1x128xf32> to vector<1x32xf32>
    %73 = vector.extract_strided_slice %71 {offsets = [0, 32], sizes = [1, 32], strides = [1, 1]} : vector<1x128xf32> to vector<1x32xf32>
    %74 = vector.extract_strided_slice %71 {offsets = [0, 64], sizes = [1, 32], strides = [1, 1]} : vector<1x128xf32> to vector<1x32xf32>
    %75 = vector.extract_strided_slice %71 {offsets = [0, 96], sizes = [1, 32], strides = [1, 1]} : vector<1x128xf32> to vector<1x32xf32>
    %76 = vector.extract_strided_slice %65 {offsets = [0, 128], sizes = [1, 32], strides = [1, 1]} : vector<1x160xf32> to vector<1x32xf32>
    %77 = math.tanh %76 : vector<1x32xf32>
    %78 = arith.index_cast %c2_i32 : i32 to index
    %c0_22 = arith.constant 0 : index
    %79 = vector.load %arg1[%78, %c0_22] : memref<8x32xf32, #tpu.memory_space<vmem>>, vector<1x32xf32>
    %80 = arith.mulf %72, %55 : vector<1x32xf32>
    %81 = arith.mulf %73, %77 : vector<1x32xf32>
    %82 = arith.addf %80, %81 : vector<1x32xf32>
    %83 = arith.mulf %75, %79 : vector<1x32xf32>
    %84 = arith.addf %82, %83 : vector<1x32xf32>
    %85 = math.tanh %84 : vector<1x32xf32>
    %86 = arith.mulf %74, %85 : vector<1x32xf32>
    %87 = tpu.concatenate %86, %84, %71, %0 in 1 : vector<1x32xf32>, vector<1x32xf32>, vector<1x128xf32>, vector<1x64xf32> -> vector<1x256xf32>
    %88 = arith.index_cast %c2_i32 : i32 to index
    %c0_23 = arith.constant 0 : index
    %89 = vector.load %arg5[%88, %c0_23] : memref<8x256xf32, #tpu.memory_space<vmem>>, vector<1x256xf32>
    tpu.vector_store %arg5[%88, %c0_23], %87 {strides = array<i32>} : memref<8x256xf32, #tpu.memory_space<vmem>>, vector<1x256xf32>,
    %c3_i32 = arith.constant 3 : i32
    %90 = arith.index_cast %c3_i32 : i32 to index
    %c0_24 = arith.constant 0 : index
    %91 = vector.load %arg0[%90, %c0_24] : memref<8x160xf32, #tpu.memory_space<vmem>>, vector<1x160xf32>
    %c0_25 = arith.constant 0 : index
    %c0_26 = arith.constant 0 : index
    %92 = vector.load %arg4[%c0_25, %c0_26] : memref<32x160xf32, #tpu.memory_space<vmem>>, vector<32x160xf32>
    %cst_27 = arith.constant dense<0.000000e+00> : vector<1x160xf32>
    %93 = tpu.matmul %86, %92, %cst_27 {dimension_numbers = #tpu.dot_dimension_numbers<[1], [0], [0], [1], [0, 0, 1, 1], [], []>} : vector<1x32xf32>, vector<32x160xf32>, vector<1x160xf32> -> vector<1x160xf32>
    %94 = arith.addf %91, %93 : vector<1x160xf32>
    %95 = vector.extract_strided_slice %94 {offsets = [0, 0], sizes = [1, 128], strides = [1, 1]} : vector<1x160xf32> to vector<1x128xf32>
    %96 = arith.negf %95 : vector<1x128xf32>
    %97 = math.exp %96 : vector<1x128xf32>
    %cst_28 = arith.constant 1.000000e+00 : f32
    %98 = vector.broadcast %cst_28 : f32 to vector<1x128xf32>
    %99 = arith.addf %98, %97 : vector<1x128xf32>
    %100 = arith.divf %98, %99 : vector<1x128xf32>
    %101 = vector.extract_strided_slice %100 {offsets = [0, 0], sizes = [1, 32], strides = [1, 1]} : vector<1x128xf32> to vector<1x32xf32>
    %102 = vector.extract_strided_slice %100 {offsets = [0, 32], sizes = [1, 32], strides = [1, 1]} : vector<1x128xf32> to vector<1x32xf32>
    %103 = vector.extract_strided_slice %100 {offsets = [0, 64], sizes = [1, 32], strides = [1, 1]} : vector<1x128xf32> to vector<1x32xf32>
    %104 = vector.extract_strided_slice %100 {offsets = [0, 96], sizes = [1, 32], strides = [1, 1]} : vector<1x128xf32> to vector<1x32xf32>
    %105 = vector.extract_strided_slice %94 {offsets = [0, 128], sizes = [1, 32], strides = [1, 1]} : vector<1x160xf32> to vector<1x32xf32>
    %106 = math.tanh %105 : vector<1x32xf32>
    %107 = arith.index_cast %c3_i32 : i32 to index
    %c0_29 = arith.constant 0 : index
    %108 = vector.load %arg1[%107, %c0_29] : memref<8x32xf32, #tpu.memory_space<vmem>>, vector<1x32xf32>
    %109 = arith.mulf %101, %84 : vector<1x32xf32>
    %110 = arith.mulf %102, %106 : vector<1x32xf32>
    %111 = arith.addf %109, %110 : vector<1x32xf32>
    %112 = arith.mulf %104, %108 : vector<1x32xf32>
    %113 = arith.addf %111, %112 : vector<1x32xf32>
    %114 = math.tanh %113 : vector<1x32xf32>
    %115 = arith.mulf %103, %114 : vector<1x32xf32>
    %116 = tpu.concatenate %115, %113, %100, %0 in 1 : vector<1x32xf32>, vector<1x32xf32>, vector<1x128xf32>, vector<1x64xf32> -> vector<1x256xf32>
    %117 = arith.index_cast %c3_i32 : i32 to index
    %c0_30 = arith.constant 0 : index
    %118 = vector.load %arg5[%117, %c0_30] : memref<8x256xf32, #tpu.memory_space<vmem>>, vector<1x256xf32>
    tpu.vector_store %arg5[%117, %c0_30], %116 {strides = array<i32>} : memref<8x256xf32, #tpu.memory_space<vmem>>, vector<1x256xf32>,
    %c4_i32 = arith.constant 4 : i32
    %119 = arith.index_cast %c4_i32 : i32 to index
    %c0_31 = arith.constant 0 : index
    %120 = vector.load %arg0[%119, %c0_31] : memref<8x160xf32, #tpu.memory_space<vmem>>, vector<1x160xf32>
    %c0_32 = arith.constant 0 : index
    %c0_33 = arith.constant 0 : index
    %121 = vector.load %arg4[%c0_32, %c0_33] : memref<32x160xf32, #tpu.memory_space<vmem>>, vector<32x160xf32>
    %cst_34 = arith.constant dense<0.000000e+00> : vector<1x160xf32>
    %122 = tpu.matmul %115, %121, %cst_34 {dimension_numbers = #tpu.dot_dimension_numbers<[1], [0], [0], [1], [0, 0, 1, 1], [], []>} : vector<1x32xf32>, vector<32x160xf32>, vector<1x160xf32> -> vector<1x160xf32>
    %123 = arith.addf %120, %122 : vector<1x160xf32>
    %124 = vector.extract_strided_slice %123 {offsets = [0, 0], sizes = [1, 128], strides = [1, 1]} : vector<1x160xf32> to vector<1x128xf32>
    %125 = arith.negf %124 : vector<1x128xf32>
    %126 = math.exp %125 : vector<1x128xf32>
    %cst_35 = arith.constant 1.000000e+00 : f32
    %127 = vector.broadcast %cst_35 : f32 to vector<1x128xf32>
    %128 = arith.addf %127, %126 : vector<1x128xf32>
    %129 = arith.divf %127, %128 : vector<1x128xf32>
    %130 = vector.extract_strided_slice %129 {offsets = [0, 0], sizes = [1, 32], strides = [1, 1]} : vector<1x128xf32> to vector<1x32xf32>
    %131 = vector.extract_strided_slice %129 {offsets = [0, 32], sizes = [1, 32], strides = [1, 1]} : vector<1x128xf32> to vector<1x32xf32>
    %132 = vector.extract_strided_slice %129 {offsets = [0, 64], sizes = [1, 32], strides = [1, 1]} : vector<1x128xf32> to vector<1x32xf32>
    %133 = vector.extract_strided_slice %129 {offsets = [0, 96], sizes = [1, 32], strides = [1, 1]} : vector<1x128xf32> to vector<1x32xf32>
    %134 = vector.extract_strided_slice %123 {offsets = [0, 128], sizes = [1, 32], strides = [1, 1]} : vector<1x160xf32> to vector<1x32xf32>
    %135 = math.tanh %134 : vector<1x32xf32>
    %136 = arith.index_cast %c4_i32 : i32 to index
    %c0_36 = arith.constant 0 : index
    %137 = vector.load %arg1[%136, %c0_36] : memref<8x32xf32, #tpu.memory_space<vmem>>, vector<1x32xf32>
    %138 = arith.mulf %130, %113 : vector<1x32xf32>
    %139 = arith.mulf %131, %135 : vector<1x32xf32>
    %140 = arith.addf %138, %139 : vector<1x32xf32>
    %141 = arith.mulf %133, %137 : vector<1x32xf32>
    %142 = arith.addf %140, %141 : vector<1x32xf32>
    %143 = math.tanh %142 : vector<1x32xf32>
    %144 = arith.mulf %132, %143 : vector<1x32xf32>
    %145 = tpu.concatenate %144, %142, %129, %0 in 1 : vector<1x32xf32>, vector<1x32xf32>, vector<1x128xf32>, vector<1x64xf32> -> vector<1x256xf32>
    %146 = arith.index_cast %c4_i32 : i32 to index
    %c0_37 = arith.constant 0 : index
    %147 = vector.load %arg5[%146, %c0_37] : memref<8x256xf32, #tpu.memory_space<vmem>>, vector<1x256xf32>
    tpu.vector_store %arg5[%146, %c0_37], %145 {strides = array<i32>} : memref<8x256xf32, #tpu.memory_space<vmem>>, vector<1x256xf32>,
    %c5_i32 = arith.constant 5 : i32
    %148 = arith.index_cast %c5_i32 : i32 to index
    %c0_38 = arith.constant 0 : index
    %149 = vector.load %arg0[%148, %c0_38] : memref<8x160xf32, #tpu.memory_space<vmem>>, vector<1x160xf32>
    %c0_39 = arith.constant 0 : index
    %c0_40 = arith.constant 0 : index
    %150 = vector.load %arg4[%c0_39, %c0_40] : memref<32x160xf32, #tpu.memory_space<vmem>>, vector<32x160xf32>
    %cst_41 = arith.constant dense<0.000000e+00> : vector<1x160xf32>
    %151 = tpu.matmul %144, %150, %cst_41 {dimension_numbers = #tpu.dot_dimension_numbers<[1], [0], [0], [1], [0, 0, 1, 1], [], []>} : vector<1x32xf32>, vector<32x160xf32>, vector<1x160xf32> -> vector<1x160xf32>
    %152 = arith.addf %149, %151 : vector<1x160xf32>
    %153 = vector.extract_strided_slice %152 {offsets = [0, 0], sizes = [1, 128], strides = [1, 1]} : vector<1x160xf32> to vector<1x128xf32>
    %154 = arith.negf %153 : vector<1x128xf32>
    %155 = math.exp %154 : vector<1x128xf32>
    %cst_42 = arith.constant 1.000000e+00 : f32
    %156 = vector.broadcast %cst_42 : f32 to vector<1x128xf32>
    %157 = arith.addf %156, %155 : vector<1x128xf32>
    %158 = arith.divf %156, %157 : vector<1x128xf32>
    %159 = vector.extract_strided_slice %158 {offsets = [0, 0], sizes = [1, 32], strides = [1, 1]} : vector<1x128xf32> to vector<1x32xf32>
    %160 = vector.extract_strided_slice %158 {offsets = [0, 32], sizes = [1, 32], strides = [1, 1]} : vector<1x128xf32> to vector<1x32xf32>
    %161 = vector.extract_strided_slice %158 {offsets = [0, 64], sizes = [1, 32], strides = [1, 1]} : vector<1x128xf32> to vector<1x32xf32>
    %162 = vector.extract_strided_slice %158 {offsets = [0, 96], sizes = [1, 32], strides = [1, 1]} : vector<1x128xf32> to vector<1x32xf32>
    %163 = vector.extract_strided_slice %152 {offsets = [0, 128], sizes = [1, 32], strides = [1, 1]} : vector<1x160xf32> to vector<1x32xf32>
    %164 = math.tanh %163 : vector<1x32xf32>
    %165 = arith.index_cast %c5_i32 : i32 to index
    %c0_43 = arith.constant 0 : index
    %166 = vector.load %arg1[%165, %c0_43] : memref<8x32xf32, #tpu.memory_space<vmem>>, vector<1x32xf32>
    %167 = arith.mulf %159, %142 : vector<1x32xf32>
    %168 = arith.mulf %160, %164 : vector<1x32xf32>
    %169 = arith.addf %167, %168 : vector<1x32xf32>
    %170 = arith.mulf %162, %166 : vector<1x32xf32>
    %171 = arith.addf %169, %170 : vector<1x32xf32>
    %172 = math.tanh %171 : vector<1x32xf32>
    %173 = arith.mulf %161, %172 : vector<1x32xf32>
    %174 = tpu.concatenate %173, %171, %158, %0 in 1 : vector<1x32xf32>, vector<1x32xf32>, vector<1x128xf32>, vector<1x64xf32> -> vector<1x256xf32>
    %175 = arith.index_cast %c5_i32 : i32 to index
    %c0_44 = arith.constant 0 : index
    %176 = vector.load %arg5[%175, %c0_44] : memref<8x256xf32, #tpu.memory_space<vmem>>, vector<1x256xf32>
    tpu.vector_store %arg5[%175, %c0_44], %174 {strides = array<i32>} : memref<8x256xf32, #tpu.memory_space<vmem>>, vector<1x256xf32>,
    %c6_i32 = arith.constant 6 : i32
    %177 = arith.index_cast %c6_i32 : i32 to index
    %c0_45 = arith.constant 0 : index
    %178 = vector.load %arg0[%177, %c0_45] : memref<8x160xf32, #tpu.memory_space<vmem>>, vector<1x160xf32>
    %c0_46 = arith.constant 0 : index
    %c0_47 = arith.constant 0 : index
    %179 = vector.load %arg4[%c0_46, %c0_47] : memref<32x160xf32, #tpu.memory_space<vmem>>, vector<32x160xf32>
    %cst_48 = arith.constant dense<0.000000e+00> : vector<1x160xf32>
    %180 = tpu.matmul %173, %179, %cst_48 {dimension_numbers = #tpu.dot_dimension_numbers<[1], [0], [0], [1], [0, 0, 1, 1], [], []>} : vector<1x32xf32>, vector<32x160xf32>, vector<1x160xf32> -> vector<1x160xf32>
    %181 = arith.addf %178, %180 : vector<1x160xf32>
    %182 = vector.extract_strided_slice %181 {offsets = [0, 0], sizes = [1, 128], strides = [1, 1]} : vector<1x160xf32> to vector<1x128xf32>
    %183 = arith.negf %182 : vector<1x128xf32>
    %184 = math.exp %183 : vector<1x128xf32>
    %cst_49 = arith.constant 1.000000e+00 : f32
    %185 = vector.broadcast %cst_49 : f32 to vector<1x128xf32>
    %186 = arith.addf %185, %184 : vector<1x128xf32>
    %187 = arith.divf %185, %186 : vector<1x128xf32>
    %188 = vector.extract_strided_slice %187 {offsets = [0, 0], sizes = [1, 32], strides = [1, 1]} : vector<1x128xf32> to vector<1x32xf32>
    %189 = vector.extract_strided_slice %187 {offsets = [0, 32], sizes = [1, 32], strides = [1, 1]} : vector<1x128xf32> to vector<1x32xf32>
    %190 = vector.extract_strided_slice %187 {offsets = [0, 64], sizes = [1, 32], strides = [1, 1]} : vector<1x128xf32> to vector<1x32xf32>
    %191 = vector.extract_strided_slice %187 {offsets = [0, 96], sizes = [1, 32], strides = [1, 1]} : vector<1x128xf32> to vector<1x32xf32>
    %192 = vector.extract_strided_slice %181 {offsets = [0, 128], sizes = [1, 32], strides = [1, 1]} : vector<1x160xf32> to vector<1x32xf32>
    %193 = math.tanh %192 : vector<1x32xf32>
    %194 = arith.index_cast %c6_i32 : i32 to index
    %c0_50 = arith.constant 0 : index
    %195 = vector.load %arg1[%194, %c0_50] : memref<8x32xf32, #tpu.memory_space<vmem>>, vector<1x32xf32>
    %196 = arith.mulf %188, %171 : vector<1x32xf32>
    %197 = arith.mulf %189, %193 : vector<1x32xf32>
    %198 = arith.addf %196, %197 : vector<1x32xf32>
    %199 = arith.mulf %191, %195 : vector<1x32xf32>
    %200 = arith.addf %198, %199 : vector<1x32xf32>
    %201 = math.tanh %200 : vector<1x32xf32>
    %202 = arith.mulf %190, %201 : vector<1x32xf32>
    %203 = tpu.concatenate %202, %200, %187, %0 in 1 : vector<1x32xf32>, vector<1x32xf32>, vector<1x128xf32>, vector<1x64xf32> -> vector<1x256xf32>
    %204 = arith.index_cast %c6_i32 : i32 to index
    %c0_51 = arith.constant 0 : index
    %205 = vector.load %arg5[%204, %c0_51] : memref<8x256xf32, #tpu.memory_space<vmem>>, vector<1x256xf32>
    tpu.vector_store %arg5[%204, %c0_51], %203 {strides = array<i32>} : memref<8x256xf32, #tpu.memory_space<vmem>>, vector<1x256xf32>,
    %c7_i32 = arith.constant 7 : i32
    %206 = arith.index_cast %c7_i32 : i32 to index
    %c0_52 = arith.constant 0 : index
    %207 = vector.load %arg0[%206, %c0_52] : memref<8x160xf32, #tpu.memory_space<vmem>>, vector<1x160xf32>
    %c0_53 = arith.constant 0 : index
    %c0_54 = arith.constant 0 : index
    %208 = vector.load %arg4[%c0_53, %c0_54] : memref<32x160xf32, #tpu.memory_space<vmem>>, vector<32x160xf32>
    %cst_55 = arith.constant dense<0.000000e+00> : vector<1x160xf32>
    %209 = tpu.matmul %202, %208, %cst_55 {dimension_numbers = #tpu.dot_dimension_numbers<[1], [0], [0], [1], [0, 0, 1, 1], [], []>} : vector<1x32xf32>, vector<32x160xf32>, vector<1x160xf32> -> vector<1x160xf32>
    %210 = arith.addf %207, %209 : vector<1x160xf32>
    %211 = vector.extract_strided_slice %210 {offsets = [0, 0], sizes = [1, 128], strides = [1, 1]} : vector<1x160xf32> to vector<1x128xf32>
    %212 = arith.negf %211 : vector<1x128xf32>
    %213 = math.exp %212 : vector<1x128xf32>
    %cst_56 = arith.constant 1.000000e+00 : f32
    %214 = vector.broadcast %cst_56 : f32 to vector<1x128xf32>
    %215 = arith.addf %214, %213 : vector<1x128xf32>
    %216 = arith.divf %214, %215 : vector<1x128xf32>
    %217 = vector.extract_strided_slice %216 {offsets = [0, 0], sizes = [1, 32], strides = [1, 1]} : vector<1x128xf32> to vector<1x32xf32>
    %218 = vector.extract_strided_slice %216 {offsets = [0, 32], sizes = [1, 32], strides = [1, 1]} : vector<1x128xf32> to vector<1x32xf32>
    %219 = vector.extract_strided_slice %216 {offsets = [0, 64], sizes = [1, 32], strides = [1, 1]} : vector<1x128xf32> to vector<1x32xf32>
    %220 = vector.extract_strided_slice %216 {offsets = [0, 96], sizes = [1, 32], strides = [1, 1]} : vector<1x128xf32> to vector<1x32xf32>
    %221 = vector.extract_strided_slice %210 {offsets = [0, 128], sizes = [1, 32], strides = [1, 1]} : vector<1x160xf32> to vector<1x32xf32>
    %222 = math.tanh %221 : vector<1x32xf32>
    %223 = arith.index_cast %c7_i32 : i32 to index
    %c0_57 = arith.constant 0 : index
    %224 = vector.load %arg1[%223, %c0_57] : memref<8x32xf32, #tpu.memory_space<vmem>>, vector<1x32xf32>
    %225 = arith.mulf %217, %200 : vector<1x32xf32>
    %226 = arith.mulf %218, %222 : vector<1x32xf32>
    %227 = arith.addf %225, %226 : vector<1x32xf32>
    %228 = arith.mulf %220, %224 : vector<1x32xf32>
    %229 = arith.addf %227, %228 : vector<1x32xf32>
    %230 = math.tanh %229 : vector<1x32xf32>
    %231 = arith.mulf %219, %230 : vector<1x32xf32>
    %232 = tpu.concatenate %231, %229, %216, %0 in 1 : vector<1x32xf32>, vector<1x32xf32>, vector<1x128xf32>, vector<1x64xf32> -> vector<1x256xf32>
    %233 = arith.index_cast %c7_i32 : i32 to index
    %c0_58 = arith.constant 0 : index
    %234 = vector.load %arg5[%233, %c0_58] : memref<8x256xf32, #tpu.memory_space<vmem>>, vector<1x256xf32>
    tpu.vector_store %arg5[%233, %c0_58], %232 {strides = array<i32>} : memref<8x256xf32, #tpu.memory_space<vmem>>, vector<1x256xf32>,
    %c8_i32 = arith.constant 8 : i32
    return
  }
}

</mosaic_0001>

<llo_original>
// kernel: dndlstm_rollout.1
$region0: #{dndlstm_rollout.1}
  #allocation0 [shape = 'u32[]', space=smem, size = 0x4, offset = 0x4, fixed_abs, tag = 'smem constant byte address 0x4 - core index']
  #allocation1 [shape = 'u32[72,128]{1,0:T(1,128)}', space=vmem, size = 0x9000, scoped, tag = 'internal scratch']
  %s0 = inlined_call_operand.vmem [shape: f32[8,160], index: 0, kind: input, shape index: {}]
  %s1 = inlined_call_operand.vmem [shape: f32[8,32], index: 1, kind: input, shape index: {}]
  %s2 = inlined_call_operand.vmem [shape: f32[1,32], index: 2, kind: input, shape index: {}]
  %s3 = inlined_call_operand.vmem [shape: f32[1,32], index: 3, kind: input, shape index: {}]
  %s4 = inlined_call_operand.vmem [shape: f32[32,160], index: 4, kind: input, shape index: {}]
  %s5 = inlined_call_operand.vmem [shape: f32[8,256], index: 5, kind: output, shape index: {}]
  %s6 = sld [smem:[#allocation0]]
  $region30: #{dndlstm_rollout.1} parent=0
    _
  %s8 = ssub.s32 1, %s6
  %s9 = scalar_select 0, %s8, %s6
  // Predicated region
  $region2: #{dndlstm_rollout.1} parent=0 // pred_check
    _
  $region3: #{dndlstm_rollout.1} parent=0 // pred_check_branch
    %11 = sbr.rel (0) target = $region5
  $region4: #{dndlstm_rollout.1} parent=0 // pred_region
    _
  $region5: #{dndlstm_rollout.1} parent=0 // pred_fallthru
    _
  // Predicated region
  $region6: #{dndlstm_rollout.1} parent=0 // pred_check
    _
  $region7: #{dndlstm_rollout.1} parent=0 // pred_check_branch
    %13 = sbr.rel (0) target = $region9
  $region8: #{dndlstm_rollout.1} parent=0 // pred_region
    _
  $region9: #{dndlstm_rollout.1} parent=0 // pred_fallthru
    _
  // Predicated region
  $region10: #{dndlstm_rollout.1} parent=0 // pred_check
    _
  $region11: #{dndlstm_rollout.1} parent=0 // pred_check_branch
    %15 = sbr.rel (0) target = $region13
  $region12: #{dndlstm_rollout.1} parent=0 // pred_region
    _
  $region13: #{dndlstm_rollout.1} parent=0 // pred_fallthru
    _
  // Predicated region
  $region14: #{dndlstm_rollout.1} parent=0 // pred_check
    _
  $region15: #{dndlstm_rollout.1} parent=0 // pred_check_branch
    %17 = sbr.rel (0) target = $region17
  $region16: #{dndlstm_rollout.1} parent=0 // pred_region
    _
  $region17: #{dndlstm_rollout.1} parent=0 // pred_fallthru
    _
  // Predicated region
  $region18: #{dndlstm_rollout.1} parent=0 // pred_check
    _
  $region19: #{dndlstm_rollout.1} parent=0 // pred_check_branch
    %19 = sbr.rel (0) target = $region21
  $region20: #{dndlstm_rollout.1} parent=0 // pred_region
    _
  $region21: #{dndlstm_rollout.1} parent=0 // pred_fallthru
    _
  %v20 = vld [vmem:[%s2] sm:$0x1]
  %v21 = vld [vmem:[%s3] sm:$0x1]
  %v22 = vld [vmem:[%s0] ss:$8 sm:$0x3]
  %v23 = vld [vmem:[%s4] sm:$0xff]
  %v24 = vld [vmem:[%s4 + $0x8] sm:$0xff]
  %v25 = vld [vmem:[%s4 + $0x10] sm:$0xff]
  %v26 = vld [vmem:[%s4 + $0x18] sm:$0xff]
  %v27 = vld [vmem:[%s4 + $0x20] sm:$0xff]
  %v28 = vld [vmem:[%s4 + $0x28] sm:$0xff]
  %v29 = vld [vmem:[%s4 + $0x30] sm:$0xff]
  %v30 = vld [vmem:[%s4 + $0x38] sm:$0xff]
  %vm31 = vcmask 261120
  %v33 = vsel %vm31, %v20, 0
  %35 = vmatpush.msra.mxu0 0.0
  %36 = vmatpush.msra.mxu0 0.0
  %37 = vmatpush.msra.mxu0 0.0
  %38 = vmatpush.msra.mxu0 0.0
  %39 = vmatpush.msra.mxu0 0.0
  %40 = vmatpush.msra.mxu0 0.0
  %41 = vmatpush.msra.mxu0 0.0
  %42 = vmatpush.msra.mxu0 0.0
  %43 = vmatpush.msra.mxu0 0.0
  %44 = vmatpush.msra.mxu0 0.0
  %45 = vmatpush.msra.mxu0 0.0
  %46 = vmatpush.msra.mxu0 0.0
  %47 = vmatpush.msra.mxu0 %v29
  %48 = vmatpush.msra.mxu0 %v27
  %49 = vmatpush.msra.mxu0 %v25
  %50 = vmatpush.msra.mxu0 %v23
  %51 = vmatmul.f32.gmra.mxu0 %v33
  %v52 = vpop.f32.mrf.mxu0
  %v53 = vadd.f32 0.0, %v52
  %54 = vdwg.mxu0
  %55 = vmatpush.msra.mxu0 0.0
  %56 = vmatpush.msra.mxu0 0.0
  %57 = vmatpush.msra.mxu0 0.0
  %58 = vmatpush.msra.mxu0 0.0
  %59 = vmatpush.msra.mxu0 0.0
  %60 = vmatpush.msra.mxu0 0.0
  %61 = vmatpush.msra.mxu0 0.0
  %62 = vmatpush.msra.mxu0 0.0
  %63 = vmatpush.msra.mxu0 0.0
  %64 = vmatpush.msra.mxu0 0.0
  %65 = vmatpush.msra.mxu0 0.0
  %66 = vmatpush.msra.mxu0 0.0
  %67 = vmatpush.msra.mxu0 %v30
  %68 = vmatpush.msra.mxu0 %v28
  %69 = vmatpush.msra.mxu0 %v26
  %70 = vmatpush.msra.mxu0 %v24
  %71 = vmatmul.f32.gmra.mxu0 %v33
  %v72 = vpop.f32.mrf.mxu0
  %v73 = vadd.f32 0.0, %v72
  %74 = vdwg.mxu0
  %v77 = vrot.slane %v73, 7
  %vm78 = vcmask 1040384
  %v79 = vsel %vm78, %v53, %v77
  %v81 = vadd.f32 %v22, %v79
  %v82 = vxor.u32 %v81, 2147483648
  %v83 = vmul.f32 %v82, 1.442695
  %v84 = vpow.pop %v83
  %v85 = vadd.f32 %v84, 1.0
  %v86 = vrcp.pop %v85
  %v87 = vmul.f32 %v85, %v86
  %v88 = vsub.f32 1.0, %v87
  %v89 = vmul.f32 %v86, %v88
  %v90 = vadd.f32 %v86, %v89
  %vm91 = vweird.f32 %v85
  %vm92 = vweird.f32 %v86
  %vm93 = vmor %vm91, %vm92
  %v94 = vsel %vm93, %v86, %v90
  %v95 = vand.u32 2147483647, %v85
  %vm96 = vcmp.eq.f32.partialorder %v95, 8.507059e+37
  %v97 = vand.u32 %v85, 2147483648
  %v98 = vor.u32 1.1754944e-38, %v97
  %v99 = vsel %vm96, %v98, %v94
  %v100 = vmul.f32 1.0, %v99
  %v102 = vrot.slane %v81, 1
  %v104 = vtanh.pop %v102
  %v105 = vld [vmem:[%s1] sm:$0x1]
  %v106 = vmul.f32 %v100, %v21
  %108 = vrot.lane.b32.xlu0 %v104, 32
  %v109 = vpop.permute.xlu0 %108
  %v111 = vmul.f32 %v100, %v109
  %113 = vrot.lane.b32.xlu0 %v111, 96
  %v114 = vpop.permute.xlu0 %113
  %v116 = vadd.f32 %v106, %v114
  %118 = vrot.lane.b32.xlu0 %v105, 96
  %v119 = vpop.permute.xlu0 %118
  %v121 = vmul.f32 %v100, %v119
  %123 = vrot.lane.b32.xlu0 %v121, 32
  %v124 = vpop.permute.xlu0 %123
  %v126 = vadd.f32 %v116, %v124
  %v127 = vtanh.pop %v126
  %129 = vrot.lane.b32.xlu0 %v127, 64
  %v130 = vpop.permute.xlu0 %129
  %v132 = vmul.f32 %v100, %v130
  %v134 = vperm.slane %v132, 0
  %135 = vrot.lane.b32.xlu0 %v134, 64
  %v136 = vpop.permute.xlu0 %135
  %v139 = vperm.slane %v126, 0
  %140 = vrot.lane.b32.xlu0 %v139, 32
  %v141 = vpop.permute.xlu0 %140
  %v144 = vperm.slane %v100, 0
  %145 = vrot.lane.b32.xlu0 %v144, 64
  %v146 = vpop.permute.xlu0 %145
  %v148 = vsel %vm31, %v136, %v141
  %vm149 = vcmask 523264
  %v150 = vsel %vm149, %v148, %v146
  %v151 = vsel %vm149, %v146, 0.0
  %v154 = vrot.slane %v151, 7
  %v155 = vsel %vm78, %v150, %v154
  %v157 = vlaneseq
  %vm158 = vcmp.ge.s32.totalorder %v157, 0
  %vm159 = vcmp.lt.s32.totalorder %v157, 256
  %vm160 = vmand %vm158, %vm159
  %161 = vst.msk [vmem:[%s5] ss:$8 sm:$0x3] %vm160, %v155
  %162 = vst.msk [vmem:[%s5] ss:$8 sm:$0x0] %vm160, %v155
  %s163 = scalar_lea.vmem %s0, 1
  %v164 = vld [vmem:[%s163] ss:$8 sm:$0x3]
  %v165 = vld [vmem:[%s4] sm:$0xff]
  %v166 = vld [vmem:[%s4 + $0x8] sm:$0xff]
  %v167 = vld [vmem:[%s4 + $0x10] sm:$0xff]
  %v168 = vld [vmem:[%s4 + $0x18] sm:$0xff]
  %v169 = vld [vmem:[%s4 + $0x20] sm:$0xff]
  %v170 = vld [vmem:[%s4 + $0x28] sm:$0xff]
  %v171 = vld [vmem:[%s4 + $0x30] sm:$0xff]
  %v172 = vld [vmem:[%s4 + $0x38] sm:$0xff]
  %v173 = vsel %vm31, %v136, 0
  %175 = vmatpush.msra.mxu0 0.0
  %176 = vmatpush.msra.mxu0 0.0
  %177 = vmatpush.msra.mxu0 0.0
  %178 = vmatpush.msra.mxu0 0.0
  %179 = vmatpush.msra.mxu0 0.0
  %180 = vmatpush.msra.mxu0 0.0
  %181 = vmatpush.msra.mxu0 0.0
  %182 = vmatpush.msra.mxu0 0.0
  %183 = vmatpush.msra.mxu0 0.0
  %184 = vmatpush.msra.mxu0 0.0
  %185 = vmatpush.msra.mxu0 0.0
  %186 = vmatpush.msra.mxu0 0.0
  %187 = vmatpush.msra.mxu0 %v171
  %188 = vmatpush.msra.mxu0 %v169
  %189 = vmatpush.msra.mxu0 %v167
  %190 = vmatpush.msra.mxu0 %v165
  %191 = vmatmul.f32.gmra.mxu0 %v173
  %v192 = vpop.f32.mrf.mxu0
  %v193 = vadd.f32 0.0, %v192
  %194 = vdwg.mxu0
  %195 = vmatpush.msra.mxu0 0.0
  %196 = vmatpush.msra.mxu0 0.0
  %197 = vmatpush.msra.mxu0 0.0
  %198 = vmatpush.msra.mxu0 0.0
  %199 = vmatpush.msra.mxu0 0.0
  %200 = vmatpush.msra.mxu0 0.0
  %201 = vmatpush.msra.mxu0 0.0
  %202 = vmatpush.msra.mxu0 0.0
  %203 = vmatpush.msra.mxu0 0.0
  %204 = vmatpush.msra.mxu0 0.0
  %205 = vmatpush.msra.mxu0 0.0
  %206 = vmatpush.msra.mxu0 0.0
  %207 = vmatpush.msra.mxu0 %v172
  %208 = vmatpush.msra.mxu0 %v170
  %209 = vmatpush.msra.mxu0 %v168
  %210 = vmatpush.msra.mxu0 %v166
  %211 = vmatmul.f32.gmra.mxu0 %v173
  %v212 = vpop.f32.mrf.mxu0
  %v213 = vadd.f32 0.0, %v212
  %214 = vdwg.mxu0
  %v217 = vrot.slane %v213, 7
  %v218 = vsel %vm78, %v193, %v217
  %v220 = vadd.f32 %v164, %v218
  %v221 = vxor.u32 %v220, 2147483648
  %v222 = vmul.f32 %v221, 1.442695
  %v223 = vpow.pop %v222
  %v224 = vadd.f32 %v223, 1.0
  %v225 = vrcp.pop %v224
  %v226 = vmul.f32 %v224, %v225
  %v227 = vsub.f32 1.0, %v226
  %v228 = vmul.f32 %v225, %v227
  %v229 = vadd.f32 %v225, %v228
  %vm230 = vweird.f32 %v224
  %vm231 = vweird.f32 %v225
  %vm232 = vmor %vm230, %vm231
  %v233 = vsel %vm232, %v225, %v229
  %v234 = vand.u32 2147483647, %v224
  %vm235 = vcmp.eq.f32.partialorder %v234, 8.507059e+37
  %v236 = vand.u32 %v224, 2147483648
  %v237 = vor.u32 1.1754944e-38, %v236
  %v238 = vsel %vm235, %v237, %v233
  %v239 = vmul.f32 1.0, %v238
  %v241 = vrot.slane %v220, 1
  %v243 = vtanh.pop %v241
  %v244 = vld [vmem:[%s1 + $0x1] sm:$0x1]
  %v245 = vmul.f32 %v239, %v126
  %247 = vrot.lane.b32.xlu0 %v243, 32
  %v248 = vpop.permute.xlu0 %247
  %v250 = vmul.f32 %v239, %v248
  %252 = vrot.lane.b32.xlu0 %v250, 96
  %v253 = vpop.permute.xlu0 %252
  %v255 = vadd.f32 %v245, %v253
  %257 = vrot.lane.b32.xlu0 %v244, 96
  %v258 = vpop.permute.xlu0 %257
  %v260 = vmul.f32 %v239, %v258
  %262 = vrot.lane.b32.xlu0 %v260, 32
  %v263 = vpop.permute.xlu0 %262
  %v265 = vadd.f32 %v255, %v263
  %v266 = vtanh.pop %v265
  %268 = vrot.lane.b32.xlu0 %v266, 64
  %v269 = vpop.permute.xlu0 %268
  %v271 = vmul.f32 %v239, %v269
  %v273 = vperm.slane %v271, 0
  %274 = vrot.lane.b32.xlu0 %v273, 64
  %v275 = vpop.permute.xlu0 %274
  %v278 = vperm.slane %v265, 0
  %279 = vrot.lane.b32.xlu0 %v278, 32
  %v280 = vpop.permute.xlu0 %279
  %v283 = vperm.slane %v239, 0
  %284 = vrot.lane.b32.xlu0 %v283, 64
  %v285 = vpop.permute.xlu0 %284
  %v287 = vsel %vm31, %v275, %v280
  %v288 = vsel %vm149, %v287, %v285
  %v289 = vsel %vm149, %v285, 0.0
  %v292 = vrot.slane %v289, 7
  %v293 = vsel %vm78, %v288, %v292
  %s295 = scalar_lea.vmem %s5, 1
  %296 = vst.msk [vmem:[%s295] ss:$8 sm:$0x3] %vm160, %v293
  %297 = vst.msk [vmem:[%s295] ss:$8 sm:$0x0] %vm160, %v293
  %s298 = scalar_lea.vmem %s0, 2
  %v299 = vld [vmem:[%s298] ss:$8 sm:$0x3]
  %v300 = vld [vmem:[%s4] sm:$0xff]
  %v301 = vld [vmem:[%s4 + $0x8] sm:$0xff]
  %v302 = vld [vmem:[%s4 + $0x10] sm:$0xff]
  %v303 = vld [vmem:[%s4 + $0x18] sm:$0xff]
  %v304 = vld [vmem:[%s4 + $0x20] sm:$0xff]
  %v305 = vld [vmem:[%s4 + $0x28] sm:$0xff]
  %v306 = vld [vmem:[%s4 + $0x30] sm:$0xff]
  %v307 = vld [vmem:[%s4 + $0x38] sm:$0xff]
  %v308 = vsel %vm31, %v275, 0
  %310 = vmatpush.msra.mxu0 0.0
  %311 = vmatpush.msra.mxu0 0.0
  %312 = vmatpush.msra.mxu0 0.0
  %313 = vmatpush.msra.mxu0 0.0
  %314 = vmatpush.msra.mxu0 0.0
  %315 = vmatpush.msra.mxu0 0.0
  %316 = vmatpush.msra.mxu0 0.0
  %317 = vmatpush.msra.mxu0 0.0
  %318 = vmatpush.msra.mxu0 0.0
  %319 = vmatpush.msra.mxu0 0.0
  %320 = vmatpush.msra.mxu0 0.0
  %321 = vmatpush.msra.mxu0 0.0
  %322 = vmatpush.msra.mxu0 %v306
  %323 = vmatpush.msra.mxu0 %v304
  %324 = vmatpush.msra.mxu0 %v302
  %325 = vmatpush.msra.mxu0 %v300
  %326 = vmatmul.f32.gmra.mxu0 %v308
  %v327 = vpop.f32.mrf.mxu0
  %v328 = vadd.f32 0.0, %v327
  %329 = vdwg.mxu0
  %330 = vmatpush.msra.mxu0 0.0
  %331 = vmatpush.msra.mxu0 0.0
  %332 = vmatpush.msra.mxu0 0.0
  %333 = vmatpush.msra.mxu0 0.0
  %334 = vmatpush.msra.mxu0 0.0
  %335 = vmatpush.msra.mxu0 0.0
  %336 = vmatpush.msra.mxu0 0.0
  %337 = vmatpush.msra.mxu0 0.0
  %338 = vmatpush.msra.mxu0 0.0
  %339 = vmatpush.msra.mxu0 0.0
  %340 = vmatpush.msra.mxu0 0.0
  %341 = vmatpush.msra.mxu0 0.0
  %342 = vmatpush.msra.mxu0 %v307
  %343 = vmatpush.msra.mxu0 %v305
  %344 = vmatpush.msra.mxu0 %v303
  %345 = vmatpush.msra.mxu0 %v301
  %346 = vmatmul.f32.gmra.mxu0 %v308
  %v347 = vpop.f32.mrf.mxu0
  %v348 = vadd.f32 0.0, %v347
  %349 = vdwg.mxu0
  %v352 = vrot.slane %v348, 7
  %v353 = vsel %vm78, %v328, %v352
  %v355 = vadd.f32 %v299, %v353
  %v356 = vxor.u32 %v355, 2147483648
  %v357 = vmul.f32 %v356, 1.442695
  %v358 = vpow.pop %v357
  %v359 = vadd.f32 %v358, 1.0
  %v360 = vrcp.pop %v359
  %v361 = vmul.f32 %v359, %v360
  %v362 = vsub.f32 1.0, %v361
  %v363 = vmul.f32 %v360, %v362
  %v364 = vadd.f32 %v360, %v363
  %vm365 = vweird.f32 %v359
  %vm366 = vweird.f32 %v360
  %vm367 = vmor %vm365, %vm366
  %v368 = vsel %vm367, %v360, %v364
  %v369 = vand.u32 2147483647, %v359
  %vm370 = vcmp.eq.f32.partialorder %v369, 8.507059e+37
  %v371 = vand.u32 %v359, 2147483648
  %v372 = vor.u32 1.1754944e-38, %v371
  %v373 = vsel %vm370, %v372, %v368
  %v374 = vmul.f32 1.0, %v373
  %v376 = vrot.slane %v355, 1
  %v378 = vtanh.pop %v376
  %v379 = vld [vmem:[%s1 + $0x2] sm:$0x1]
  %v380 = vmul.f32 %v374, %v265
  %382 = vrot.lane.b32.xlu0 %v378, 32
  %v383 = vpop.permute.xlu0 %382
  %v385 = vmul.f32 %v374, %v383
  %387 = vrot.lane.b32.xlu0 %v385, 96
  %v388 = vpop.permute.xlu0 %387
  %v390 = vadd.f32 %v380, %v388
  %392 = vrot.lane.b32.xlu0 %v379, 96
  %v393 = vpop.permute.xlu0 %392
  %v395 = vmul.f32 %v374, %v393
  %397 = vrot.lane.b32.xlu0 %v395, 32
  %v398 = vpop.permute.xlu0 %397
  %v400 = vadd.f32 %v390, %v398
  %v401 = vtanh.pop %v400
  %403 = vrot.lane.b32.xlu0 %v401, 64
  %v404 = vpop.permute.xlu0 %403
  %v406 = vmul.f32 %v374, %v404
  %v408 = vperm.slane %v406, 0
  %409 = vrot.lane.b32.xlu0 %v408, 64
  %v410 = vpop.permute.xlu0 %409
  %v413 = vperm.slane %v400, 0
  %414 = vrot.lane.b32.xlu0 %v413, 32
  %v415 = vpop.permute.xlu0 %414
  %v418 = vperm.slane %v374, 0
  %419 = vrot.lane.b32.xlu0 %v418, 64
  %v420 = vpop.permute.xlu0 %419
  %v422 = vsel %vm31, %v410, %v415
  %v423 = vsel %vm149, %v422, %v420
  %v424 = vsel %vm149, %v420, 0.0
  %v427 = vrot.slane %v424, 7
  %v428 = vsel %vm78, %v423, %v427
  %s430 = scalar_lea.vmem %s5, 2
  %431 = vst.msk [vmem:[%s430] ss:$8 sm:$0x3] %vm160, %v428
  %432 = vst.msk [vmem:[%s430] ss:$8 sm:$0x0] %vm160, %v428
  %s433 = scalar_lea.vmem %s0, 3
  %v434 = vld [vmem:[%s433] ss:$8 sm:$0x3]
  %v435 = vld [vmem:[%s4] sm:$0xff]
  %v436 = vld [vmem:[%s4 + $0x8] sm:$0xff]
  %v437 = vld [vmem:[%s4 + $0x10] sm:$0xff]
  %v438 = vld [vmem:[%s4 + $0x18] sm:$0xff]
  %v439 = vld [vmem:[%s4 + $0x20] sm:$0xff]
  %v440 = vld [vmem:[%s4 + $0x28] sm:$0xff]
  %v441 = vld [vmem:[%s4 + $0x30] sm:$0xff]
  %v442 = vld [vmem:[%s4 + $0x38] sm:$0xff]
  %v443 = vsel %vm31, %v410, 0
  %445 = vmatpush.msra.mxu0 0.0
  %446 = vmatpush.msra.mxu0 0.0
  %447 = vmatpush.msra.mxu0 0.0
  %448 = vmatpush.msra.mxu0 0.0
  %449 = vmatpush.msra.mxu0 0.0
  %450 = vmatpush.msra.mxu0 0.0
  %451 = vmatpush.msra.mxu0 0.0
  %452 = vmatpush.msra.mxu0 0.0
  %453 = vmatpush.msra.mxu0 0.0
  %454 = vmatpush.msra.mxu0 0.0
  %455 = vmatpush.msra.mxu0 0.0
  %456 = vmatpush.msra.mxu0 0.0
  %457 = vmatpush.msra.mxu0 %v441
  %458 = vmatpush.msra.mxu0 %v439
  %459 = vmatpush.msra.mxu0 %v437
  %460 = vmatpush.msra.mxu0 %v435
  %461 = vmatmul.f32.gmra.mxu0 %v443
  %v462 = vpop.f32.mrf.mxu0
  %v463 = vadd.f32 0.0, %v462
  %464 = vdwg.mxu0
  %465 = vmatpush.msra.mxu0 0.0
  %466 = vmatpush.msra.mxu0 0.0
  %467 = vmatpush.msra.mxu0 0.0
  %468 = vmatpush.msra.mxu0 0.0
  %469 = vmatpush.msra.mxu0 0.0
  %470 = vmatpush.msra.mxu0 0.0
  %471 = vmatpush.msra.mxu0 0.0
  %472 = vmatpush.msra.mxu0 0.0
  %473 = vmatpush.msra.mxu0 0.0
  %474 = vmatpush.msra.mxu0 0.0
  %475 = vmatpush.msra.mxu0 0.0
  %476 = vmatpush.msra.mxu0 0.0
  %477 = vmatpush.msra.mxu0 %v442
  %478 = vmatpush.msra.mxu0 %v440
  %479 = vmatpush.msra.mxu0 %v438
  %480 = vmatpush.msra.mxu0 %v436
  %481 = vmatmul.f32.gmra.mxu0 %v443
  %v482 = vpop.f32.mrf.mxu0
  %v483 = vadd.f32 0.0, %v482
  %484 = vdwg.mxu0
  %v487 = vrot.slane %v483, 7
  %v488 = vsel %vm78, %v463, %v487
  %v490 = vadd.f32 %v434, %v488
  %v491 = vxor.u32 %v490, 2147483648
  %v492 = vmul.f32 %v491, 1.442695
  %v493 = vpow.pop %v492
  %v494 = vadd.f32 %v493, 1.0
  %v495 = vrcp.pop %v494
  %v496 = vmul.f32 %v494, %v495
  %v497 = vsub.f32 1.0, %v496
  %v498 = vmul.f32 %v495, %v497
  %v499 = vadd.f32 %v495, %v498
  %vm500 = vweird.f32 %v494
  %vm501 = vweird.f32 %v495
  %vm502 = vmor %vm500, %vm501
  %v503 = vsel %vm502, %v495, %v499
  %v504 = vand.u32 2147483647, %v494
  %vm505 = vcmp.eq.f32.partialorder %v504, 8.507059e+37
  %v506 = vand.u32 %v494, 2147483648
  %v507 = vor.u32 1.1754944e-38, %v506
  %v508 = vsel %vm505, %v507, %v503
  %v509 = vmul.f32 1.0, %v508
  %v511 = vrot.slane %v490, 1
  %v513 = vtanh.pop %v511
  %v514 = vld [vmem:[%s1 + $0x3] sm:$0x1]
  %v515 = vmul.f32 %v509, %v400
  %517 = vrot.lane.b32.xlu0 %v513, 32
  %v518 = vpop.permute.xlu0 %517
  %v520 = vmul.f32 %v509, %v518
  %522 = vrot.lane.b32.xlu0 %v520, 96
  %v523 = vpop.permute.xlu0 %522
  %v525 = vadd.f32 %v515, %v523
  %527 = vrot.lane.b32.xlu0 %v514, 96
  %v528 = vpop.permute.xlu0 %527
  %v530 = vmul.f32 %v509, %v528
  %532 = vrot.lane.b32.xlu0 %v530, 32
  %v533 = vpop.permute.xlu0 %532
  %v535 = vadd.f32 %v525, %v533
  %v536 = vtanh.pop %v535
  %538 = vrot.lane.b32.xlu0 %v536, 64
  %v539 = vpop.permute.xlu0 %538
  %v541 = vmul.f32 %v509, %v539
  %v543 = vperm.slane %v541, 0
  %544 = vrot.lane.b32.xlu0 %v543, 64
  %v545 = vpop.permute.xlu0 %544
  %v548 = vperm.slane %v535, 0
  %549 = vrot.lane.b32.xlu0 %v548, 32
  %v550 = vpop.permute.xlu0 %549
  %v553 = vperm.slane %v509, 0
  %554 = vrot.lane.b32.xlu0 %v553, 64
  %v555 = vpop.permute.xlu0 %554
  %v557 = vsel %vm31, %v545, %v550
  %v558 = vsel %vm149, %v557, %v555
  %v559 = vsel %vm149, %v555, 0.0
  %v562 = vrot.slane %v559, 7
  %v563 = vsel %vm78, %v558, %v562
  %s565 = scalar_lea.vmem %s5, 3
  %566 = vst.msk [vmem:[%s565] ss:$8 sm:$0x3] %vm160, %v563
  %567 = vst.msk [vmem:[%s565] ss:$8 sm:$0x0] %vm160, %v563
  %s568 = scalar_lea.vmem %s0, 4
  %v569 = vld [vmem:[%s568] ss:$8 sm:$0x3]
  %v570 = vld [vmem:[%s4] sm:$0xff]
  %v571 = vld [vmem:[%s4 + $0x8] sm:$0xff]
  %v572 = vld [vmem:[%s4 + $0x10] sm:$0xff]
  %v573 = vld [vmem:[%s4 + $0x18] sm:$0xff]
  %v574 = vld [vmem:[%s4 + $0x20] sm:$0xff]
  %v575 = vld [vmem:[%s4 + $0x28] sm:$0xff]
  %v576 = vld [vmem:[%s4 + $0x30] sm:$0xff]
  %v577 = vld [vmem:[%s4 + $0x38] sm:$0xff]
  %v578 = vsel %vm31, %v545, 0
  %580 = vmatpush.msra.mxu0 0.0
  %581 = vmatpush.msra.mxu0 0.0
  %582 = vmatpush.msra.mxu0 0.0
  %583 = vmatpush.msra.mxu0 0.0
  %584 = vmatpush.msra.mxu0 0.0
  %585 = vmatpush.msra.mxu0 0.0
  %586 = vmatpush.msra.mxu0 0.0
  %587 = vmatpush.msra.mxu0 0.0
  %588 = vmatpush.msra.mxu0 0.0
  %589 = vmatpush.msra.mxu0 0.0
  %590 = vmatpush.msra.mxu0 0.0
  %591 = vmatpush.msra.mxu0 0.0
  %592 = vmatpush.msra.mxu0 %v576
  %593 = vmatpush.msra.mxu0 %v574
  %594 = vmatpush.msra.mxu0 %v572
  %595 = vmatpush.msra.mxu0 %v570
  %596 = vmatmul.f32.gmra.mxu0 %v578
  %v597 = vpop.f32.mrf.mxu0
  %v598 = vadd.f32 0.0, %v597
  %599 = vdwg.mxu0
  %600 = vmatpush.msra.mxu0 0.0
  %601 = vmatpush.msra.mxu0 0.0
  %602 = vmatpush.msra.mxu0 0.0
  %603 = vmatpush.msra.mxu0 0.0
  %604 = vmatpush.msra.mxu0 0.0
  %605 = vmatpush.msra.mxu0 0.0
  %606 = vmatpush.msra.mxu0 0.0
  %607 = vmatpush.msra.mxu0 0.0
  %608 = vmatpush.msra.mxu0 0.0
  %609 = vmatpush.msra.mxu0 0.0
  %610 = vmatpush.msra.mxu0 0.0
  %611 = vmatpush.msra.mxu0 0.0
  %612 = vmatpush.msra.mxu0 %v577
  %613 = vmatpush.msra.mxu0 %v575
  %614 = vmatpush.msra.mxu0 %v573
  %615 = vmatpush.msra.mxu0 %v571
  %616 = vmatmul.f32.gmra.mxu0 %v578
  %v617 = vpop.f32.mrf.mxu0
  %v618 = vadd.f32 0.0, %v617
  %619 = vdwg.mxu0
  %v622 = vrot.slane %v618, 7
  %v623 = vsel %vm78, %v598, %v622
  %v625 = vadd.f32 %v569, %v623
  %v626 = vxor.u32 %v625, 2147483648
  %v627 = vmul.f32 %v626, 1.442695
  %v628 = vpow.pop %v627
  %v629 = vadd.f32 %v628, 1.0
  %v630 = vrcp.pop %v629
  %v631 = vmul.f32 %v629, %v630
  %v632 = vsub.f32 1.0, %v631
  %v633 = vmul.f32 %v630, %v632
  %v634 = vadd.f32 %v630, %v633
  %vm635 = vweird.f32 %v629
  %vm636 = vweird.f32 %v630
  %vm637 = vmor %vm635, %vm636
  %v638 = vsel %vm637, %v630, %v634
  %v639 = vand.u32 2147483647, %v629
  %vm640 = vcmp.eq.f32.partialorder %v639, 8.507059e+37
  %v641 = vand.u32 %v629, 2147483648
  %v642 = vor.u32 1.1754944e-38, %v641
  %v643 = vsel %vm640, %v642, %v638
  %v644 = vmul.f32 1.0, %v643
  %v646 = vrot.slane %v625, 1
  %v648 = vtanh.pop %v646
  %v649 = vld [vmem:[%s1 + $0x4] sm:$0x1]
  %v650 = vmul.f32 %v644, %v535
  %652 = vrot.lane.b32.xlu0 %v648, 32
  %v653 = vpop.permute.xlu0 %652
  %v655 = vmul.f32 %v644, %v653
  %657 = vrot.lane.b32.xlu0 %v655, 96
  %v658 = vpop.permute.xlu0 %657
  %v660 = vadd.f32 %v650, %v658
  %662 = vrot.lane.b32.xlu0 %v649, 96
  %v663 = vpop.permute.xlu0 %662
  %v665 = vmul.f32 %v644, %v663
  %667 = vrot.lane.b32.xlu0 %v665, 32
  %v668 = vpop.permute.xlu0 %667
  %v670 = vadd.f32 %v660, %v668
  %v671 = vtanh.pop %v670
  %673 = vrot.lane.b32.xlu0 %v671, 64
  %v674 = vpop.permute.xlu0 %673
  %v676 = vmul.f32 %v644, %v674
  %v678 = vperm.slane %v676, 0
  %679 = vrot.lane.b32.xlu0 %v678, 64
  %v680 = vpop.permute.xlu0 %679
  %v683 = vperm.slane %v670, 0
  %684 = vrot.lane.b32.xlu0 %v683, 32
  %v685 = vpop.permute.xlu0 %684
  %v688 = vperm.slane %v644, 0
  %689 = vrot.lane.b32.xlu0 %v688, 64
  %v690 = vpop.permute.xlu0 %689
  %v692 = vsel %vm31, %v680, %v685
  %v693 = vsel %vm149, %v692, %v690
  %v694 = vsel %vm149, %v690, 0.0
  %v697 = vrot.slane %v694, 7
  %v698 = vsel %vm78, %v693, %v697
  %s700 = scalar_lea.vmem %s5, 4
  %701 = vst.msk [vmem:[%s700] ss:$8 sm:$0x3] %vm160, %v698
  %702 = vst.msk [vmem:[%s700] ss:$8 sm:$0x0] %vm160, %v698
  %s703 = scalar_lea.vmem %s0, 5
  %v704 = vld [vmem:[%s703] ss:$8 sm:$0x3]
  %v705 = vld [vmem:[%s4] sm:$0xff]
  %v706 = vld [vmem:[%s4 + $0x8] sm:$0xff]
  %v707 = vld [vmem:[%s4 + $0x10] sm:$0xff]
  %v708 = vld [vmem:[%s4 + $0x18] sm:$0xff]
  %v709 = vld [vmem:[%s4 + $0x20] sm:$0xff]
  %v710 = vld [vmem:[%s4 + $0x28] sm:$0xff]
  %v711 = vld [vmem:[%s4 + $0x30] sm:$0xff]
  %v712 = vld [vmem:[%s4 + $0x38] sm:$0xff]
  %v713 = vsel %vm31, %v680, 0
  %715 = vmatpush.msra.mxu0 0.0
  %716 = vmatpush.msra.mxu0 0.0
  %717 = vmatpush.msra.mxu0 0.0
  %718 = vmatpush.msra.mxu0 0.0
  %719 = vmatpush.msra.mxu0 0.0
  %720 = vmatpush.msra.mxu0 0.0
  %721 = vmatpush.msra.mxu0 0.0
  %722 = vmatpush.msra.mxu0 0.0
  %723 = vmatpush.msra.mxu0 0.0
  %724 = vmatpush.msra.mxu0 0.0
  %725 = vmatpush.msra.mxu0 0.0
  %726 = vmatpush.msra.mxu0 0.0
  %727 = vmatpush.msra.mxu0 %v711
  %728 = vmatpush.msra.mxu0 %v709
  %729 = vmatpush.msra.mxu0 %v707
  %730 = vmatpush.msra.mxu0 %v705
  %731 = vmatmul.f32.gmra.mxu0 %v713
  %v732 = vpop.f32.mrf.mxu0
  %v733 = vadd.f32 0.0, %v732
  %734 = vdwg.mxu0
  %735 = vmatpush.msra.mxu0 0.0
  %736 = vmatpush.msra.mxu0 0.0
  %737 = vmatpush.msra.mxu0 0.0
  %738 = vmatpush.msra.mxu0 0.0
  %739 = vmatpush.msra.mxu0 0.0
  %740 = vmatpush.msra.mxu0 0.0
  %741 = vmatpush.msra.mxu0 0.0
  %742 = vmatpush.msra.mxu0 0.0
  %743 = vmatpush.msra.mxu0 0.0
  %744 = vmatpush.msra.mxu0 0.0
  %745 = vmatpush.msra.mxu0 0.0
  %746 = vmatpush.msra.mxu0 0.0
  %747 = vmatpush.msra.mxu0 %v712
  %748 = vmatpush.msra.mxu0 %v710
  %749 = vmatpush.msra.mxu0 %v708
  %750 = vmatpush.msra.mxu0 %v706
  %751 = vmatmul.f32.gmra.mxu0 %v713
  %v752 = vpop.f32.mrf.mxu0
  %v753 = vadd.f32 0.0, %v752
  %754 = vdwg.mxu0
  %v757 = vrot.slane %v753, 7
  %v758 = vsel %vm78, %v733, %v757
  %v760 = vadd.f32 %v704, %v758
  %v761 = vxor.u32 %v760, 2147483648
  %v762 = vmul.f32 %v761, 1.442695
  %v763 = vpow.pop %v762
  %v764 = vadd.f32 %v763, 1.0
  %v765 = vrcp.pop %v764
  %v766 = vmul.f32 %v764, %v765
  %v767 = vsub.f32 1.0, %v766
  %v768 = vmul.f32 %v765, %v767
  %v769 = vadd.f32 %v765, %v768
  %vm770 = vweird.f32 %v764
  %vm771 = vweird.f32 %v765
  %vm772 = vmor %vm770, %vm771
  %v773 = vsel %vm772, %v765, %v769
  %v774 = vand.u32 2147483647, %v764
  %vm775 = vcmp.eq.f32.partialorder %v774, 8.507059e+37
  %v776 = vand.u32 %v764, 2147483648
  %v777 = vor.u32 1.1754944e-38, %v776
  %v778 = vsel %vm775, %v777, %v773
  %v779 = vmul.f32 1.0, %v778
  %v781 = vrot.slane %v760, 1
  %v783 = vtanh.pop %v781
  %v784 = vld [vmem:[%s1 + $0x5] sm:$0x1]
  %v785 = vmul.f32 %v779, %v670
  %787 = vrot.lane.b32.xlu0 %v783, 32
  %v788 = vpop.permute.xlu0 %787
  %v790 = vmul.f32 %v779, %v788
  %792 = vrot.lane.b32.xlu0 %v790, 96
  %v793 = vpop.permute.xlu0 %792
  %v795 = vadd.f32 %v785, %v793
  %797 = vrot.lane.b32.xlu0 %v784, 96
  %v798 = vpop.permute.xlu0 %797
  %v800 = vmul.f32 %v779, %v798
  %802 = vrot.lane.b32.xlu0 %v800, 32
  %v803 = vpop.permute.xlu0 %802
  %v805 = vadd.f32 %v795, %v803
  %v806 = vtanh.pop %v805
  %808 = vrot.lane.b32.xlu0 %v806, 64
  %v809 = vpop.permute.xlu0 %808
  %v811 = vmul.f32 %v779, %v809
  %v813 = vperm.slane %v811, 0
  %814 = vrot.lane.b32.xlu0 %v813, 64
  %v815 = vpop.permute.xlu0 %814
  %v818 = vperm.slane %v805, 0
  %819 = vrot.lane.b32.xlu0 %v818, 32
  %v820 = vpop.permute.xlu0 %819
  %v823 = vperm.slane %v779, 0
  %824 = vrot.lane.b32.xlu0 %v823, 64
  %v825 = vpop.permute.xlu0 %824
  %v827 = vsel %vm31, %v815, %v820
  %v828 = vsel %vm149, %v827, %v825
  %v829 = vsel %vm149, %v825, 0.0
  %v832 = vrot.slane %v829, 7
  %v833 = vsel %vm78, %v828, %v832
  %s835 = scalar_lea.vmem %s5, 5
  %836 = vst.msk [vmem:[%s835] ss:$8 sm:$0x3] %vm160, %v833
  %837 = vst.msk [vmem:[%s835] ss:$8 sm:$0x0] %vm160, %v833
  %s838 = scalar_lea.vmem %s0, 6
  %v839 = vld [vmem:[%s838] ss:$8 sm:$0x3]
  %v840 = vld [vmem:[%s4] sm:$0xff]
  %v841 = vld [vmem:[%s4 + $0x8] sm:$0xff]
  %v842 = vld [vmem:[%s4 + $0x10] sm:$0xff]
  %v843 = vld [vmem:[%s4 + $0x18] sm:$0xff]
  %v844 = vld [vmem:[%s4 + $0x20] sm:$0xff]
  %v845 = vld [vmem:[%s4 + $0x28] sm:$0xff]
  %v846 = vld [vmem:[%s4 + $0x30] sm:$0xff]
  %v847 = vld [vmem:[%s4 + $0x38] sm:$0xff]
  %v848 = vsel %vm31, %v815, 0
  %850 = vmatpush.msra.mxu0 0.0
  %851 = vmatpush.msra.mxu0 0.0
  %852 = vmatpush.msra.mxu0 0.0
  %853 = vmatpush.msra.mxu0 0.0
  %854 = vmatpush.msra.mxu0 0.0
  %855 = vmatpush.msra.mxu0 0.0
  %856 = vmatpush.msra.mxu0 0.0
  %857 = vmatpush.msra.mxu0 0.0
  %858 = vmatpush.msra.mxu0 0.0
  %859 = vmatpush.msra.mxu0 0.0
  %860 = vmatpush.msra.mxu0 0.0
  %861 = vmatpush.msra.mxu0 0.0
  %862 = vmatpush.msra.mxu0 %v846
  %863 = vmatpush.msra.mxu0 %v844
  %864 = vmatpush.msra.mxu0 %v842
  %865 = vmatpush.msra.mxu0 %v840
  %866 = vmatmul.f32.gmra.mxu0 %v848
  %v867 = vpop.f32.mrf.mxu0
  %v868 = vadd.f32 0.0, %v867
  %869 = vdwg.mxu0
  %870 = vmatpush.msra.mxu0 0.0
  %871 = vmatpush.msra.mxu0 0.0
  %872 = vmatpush.msra.mxu0 0.0
  %873 = vmatpush.msra.mxu0 0.0
  %874 = vmatpush.msra.mxu0 0.0
  %875 = vmatpush.msra.mxu0 0.0
  %876 = vmatpush.msra.mxu0 0.0
  %877 = vmatpush.msra.mxu0 0.0
  %878 = vmatpush.msra.mxu0 0.0
  %879 = vmatpush.msra.mxu0 0.0
  %880 = vmatpush.msra.mxu0 0.0
  %881 = vmatpush.msra.mxu0 0.0
  %882 = vmatpush.msra.mxu0 %v847
  %883 = vmatpush.msra.mxu0 %v845
  %884 = vmatpush.msra.mxu0 %v843
  %885 = vmatpush.msra.mxu0 %v841
  %886 = vmatmul.f32.gmra.mxu0 %v848
  %v887 = vpop.f32.mrf.mxu0
  %v888 = vadd.f32 0.0, %v887
  %889 = vdwg.mxu0
  %v892 = vrot.slane %v888, 7
  %v893 = vsel %vm78, %v868, %v892
  %v895 = vadd.f32 %v839, %v893
  %v896 = vxor.u32 %v895, 2147483648
  %v897 = vmul.f32 %v896, 1.442695
  %v898 = vpow.pop %v897
  %v899 = vadd.f32 %v898, 1.0
  %v900 = vrcp.pop %v899
  %v901 = vmul.f32 %v899, %v900
  %v902 = vsub.f32 1.0, %v901
  %v903 = vmul.f32 %v900, %v902
  %v904 = vadd.f32 %v900, %v903
  %vm905 = vweird.f32 %v899
  %vm906 = vweird.f32 %v900
  %vm907 = vmor %vm905, %vm906
  %v908 = vsel %vm907, %v900, %v904
  %v909 = vand.u32 2147483647, %v899
  %vm910 = vcmp.eq.f32.partialorder %v909, 8.507059e+37
  %v911 = vand.u32 %v899, 2147483648
  %v912 = vor.u32 1.1754944e-38, %v911
  %v913 = vsel %vm910, %v912, %v908
  %v914 = vmul.f32 1.0, %v913
  %v916 = vrot.slane %v895, 1
  %v918 = vtanh.pop %v916
  %v919 = vld [vmem:[%s1 + $0x6] sm:$0x1]
  %v920 = vmul.f32 %v914, %v805
  %922 = vrot.lane.b32.xlu0 %v918, 32
  %v923 = vpop.permute.xlu0 %922
  %v925 = vmul.f32 %v914, %v923
  %927 = vrot.lane.b32.xlu0 %v925, 96
  %v928 = vpop.permute.xlu0 %927
  %v930 = vadd.f32 %v920, %v928
  %932 = vrot.lane.b32.xlu0 %v919, 96
  %v933 = vpop.permute.xlu0 %932
  %v935 = vmul.f32 %v914, %v933
  %937 = vrot.lane.b32.xlu0 %v935, 32
  %v938 = vpop.permute.xlu0 %937
  %v940 = vadd.f32 %v930, %v938
  %v941 = vtanh.pop %v940
  %943 = vrot.lane.b32.xlu0 %v941, 64
  %v944 = vpop.permute.xlu0 %943
  %v946 = vmul.f32 %v914, %v944
  %v948 = vperm.slane %v946, 0
  %949 = vrot.lane.b32.xlu0 %v948, 64
  %v950 = vpop.permute.xlu0 %949
  %v953 = vperm.slane %v940, 0
  %954 = vrot.lane.b32.xlu0 %v953, 32
  %v955 = vpop.permute.xlu0 %954
  %v958 = vperm.slane %v914, 0
  %959 = vrot.lane.b32.xlu0 %v958, 64
  %v960 = vpop.permute.xlu0 %959
  %v962 = vsel %vm31, %v950, %v955
  %v963 = vsel %vm149, %v962, %v960
  %v964 = vsel %vm149, %v960, 0.0
  %v967 = vrot.slane %v964, 7
  %v968 = vsel %vm78, %v963, %v967
  %s970 = scalar_lea.vmem %s5, 6
  %971 = vst.msk [vmem:[%s970] ss:$8 sm:$0x3] %vm160, %v968
  %972 = vst.msk [vmem:[%s970] ss:$8 sm:$0x0] %vm160, %v968
  %s973 = scalar_lea.vmem %s0, 7
  %v974 = vld [vmem:[%s973] ss:$8 sm:$0x3]
  %v975 = vld [vmem:[%s4] sm:$0xff]
  %v976 = vld [vmem:[%s4 + $0x8] sm:$0xff]
  %v977 = vld [vmem:[%s4 + $0x10] sm:$0xff]
  %v978 = vld [vmem:[%s4 + $0x18] sm:$0xff]
  %v979 = vld [vmem:[%s4 + $0x20] sm:$0xff]
  %v980 = vld [vmem:[%s4 + $0x28] sm:$0xff]
  %v981 = vld [vmem:[%s4 + $0x30] sm:$0xff]
  %v982 = vld [vmem:[%s4 + $0x38] sm:$0xff]
  %v983 = vsel %vm31, %v950, 0
  %985 = vmatpush.msra.mxu0 0.0
  %986 = vmatpush.msra.mxu0 0.0
  %987 = vmatpush.msra.mxu0 0.0
  %988 = vmatpush.msra.mxu0 0.0
  %989 = vmatpush.msra.mxu0 0.0
  %990 = vmatpush.msra.mxu0 0.0
  %991 = vmatpush.msra.mxu0 0.0
  %992 = vmatpush.msra.mxu0 0.0
  %993 = vmatpush.msra.mxu0 0.0
  %994 = vmatpush.msra.mxu0 0.0
  %995 = vmatpush.msra.mxu0 0.0
  %996 = vmatpush.msra.mxu0 0.0
  %997 = vmatpush.msra.mxu0 %v981
  %998 = vmatpush.msra.mxu0 %v979
  %999 = vmatpush.msra.mxu0 %v977
  %1000 = vmatpush.msra.mxu0 %v975
  %1001 = vmatmul.f32.gmra.mxu0 %v983
  %v1002 = vpop.f32.mrf.mxu0
  %v1003 = vadd.f32 0.0, %v1002
  %1004 = vdwg.mxu0
  %1005 = vmatpush.msra.mxu0 0.0
  %1006 = vmatpush.msra.mxu0 0.0
  %1007 = vmatpush.msra.mxu0 0.0
  %1008 = vmatpush.msra.mxu0 0.0
  %1009 = vmatpush.msra.mxu0 0.0
  %1010 = vmatpush.msra.mxu0 0.0
  %1011 = vmatpush.msra.mxu0 0.0
  %1012 = vmatpush.msra.mxu0 0.0
  %1013 = vmatpush.msra.mxu0 0.0
  %1014 = vmatpush.msra.mxu0 0.0
  %1015 = vmatpush.msra.mxu0 0.0
  %1016 = vmatpush.msra.mxu0 0.0
  %1017 = vmatpush.msra.mxu0 %v982
  %1018 = vmatpush.msra.mxu0 %v980
  %1019 = vmatpush.msra.mxu0 %v978
  %1020 = vmatpush.msra.mxu0 %v976
  %1021 = vmatmul.f32.gmra.mxu0 %v983
  %v1022 = vpop.f32.mrf.mxu0
  %v1023 = vadd.f32 0.0, %v1022
  %1024 = vdwg.mxu0
  %v1027 = vrot.slane %v1023, 7
  %v1028 = vsel %vm78, %v1003, %v1027
  %v1030 = vadd.f32 %v974, %v1028
  %v1031 = vxor.u32 %v1030, 2147483648
  %v1032 = vmul.f32 %v1031, 1.442695
  %v1033 = vpow.pop %v1032
  %v1034 = vadd.f32 %v1033, 1.0
  %v1035 = vrcp.pop %v1034
  %v1036 = vmul.f32 %v1034, %v1035
  %v1037 = vsub.f32 1.0, %v1036
  %v1038 = vmul.f32 %v1035, %v1037
  %v1039 = vadd.f32 %v1035, %v1038
  %vm1040 = vweird.f32 %v1034
  %vm1041 = vweird.f32 %v1035
  %vm1042 = vmor %vm1040, %vm1041
  %v1043 = vsel %vm1042, %v1035, %v1039
  %v1044 = vand.u32 2147483647, %v1034
  %vm1045 = vcmp.eq.f32.partialorder %v1044, 8.507059e+37
  %v1046 = vand.u32 %v1034, 2147483648
  %v1047 = vor.u32 1.1754944e-38, %v1046
  %v1048 = vsel %vm1045, %v1047, %v1043
  %v1049 = vmul.f32 1.0, %v1048
  %v1051 = vrot.slane %v1030, 1
  %v1053 = vtanh.pop %v1051
  %v1054 = vld [vmem:[%s1 + $0x7] sm:$0x1]
  %v1055 = vmul.f32 %v1049, %v940
  %1057 = vrot.lane.b32.xlu0 %v1053, 32
  %v1058 = vpop.permute.xlu0 %1057
  %v1060 = vmul.f32 %v1049, %v1058
  %1062 = vrot.lane.b32.xlu0 %v1060, 96
  %v1063 = vpop.permute.xlu0 %1062
  %v1065 = vadd.f32 %v1055, %v1063
  %1067 = vrot.lane.b32.xlu0 %v1054, 96
  %v1068 = vpop.permute.xlu0 %1067
  %v1070 = vmul.f32 %v1049, %v1068
  %1072 = vrot.lane.b32.xlu0 %v1070, 32
  %v1073 = vpop.permute.xlu0 %1072
  %v1075 = vadd.f32 %v1065, %v1073
  %v1076 = vtanh.pop %v1075
  %1078 = vrot.lane.b32.xlu0 %v1076, 64
  %v1079 = vpop.permute.xlu0 %1078
  %v1081 = vmul.f32 %v1049, %v1079
  %v1083 = vperm.slane %v1081, 0
  %1084 = vrot.lane.b32.xlu0 %v1083, 64
  %v1085 = vpop.permute.xlu0 %1084
  %v1088 = vperm.slane %v1075, 0
  %1089 = vrot.lane.b32.xlu0 %v1088, 32
  %v1090 = vpop.permute.xlu0 %1089
  %v1093 = vperm.slane %v1049, 0
  %1094 = vrot.lane.b32.xlu0 %v1093, 64
  %v1095 = vpop.permute.xlu0 %1094
  %v1097 = vsel %vm31, %v1085, %v1090
  %v1098 = vsel %vm149, %v1097, %v1095
  %v1099 = vsel %vm149, %v1095, 0.0
  %v1102 = vrot.slane %v1099, 7
  %v1103 = vsel %vm78, %v1098, %v1102
  %s1105 = scalar_lea.vmem %s5, 7
  %1106 = vst.msk [vmem:[%s1105] ss:$8 sm:$0x3] %vm160, %v1103
  %1107 = vst.msk [vmem:[%s1105] ss:$8 sm:$0x0] %vm160, %v1103
  // Predicated region
  $region22: #{dndlstm_rollout.1} parent=0 // pred_check
    _
  $region23: #{dndlstm_rollout.1} parent=0 // pred_check_branch
    %1109 = sbr.rel (0) target = $region25
  $region24: #{dndlstm_rollout.1} parent=0 // pred_region
    _
  $region25: #{dndlstm_rollout.1} parent=0 // pred_fallthru
    _
  // Predicated region
  $region26: #{dndlstm_rollout.1} parent=0 // pred_check
    _
  $region27: #{dndlstm_rollout.1} parent=0 // pred_check_branch
    %1111 = sbr.rel (0) target = $region29
  $region28: #{dndlstm_rollout.1} parent=0 // pred_region
    _
  $region29: #{dndlstm_rollout.1} parent=0 // pred_fallthru
    _

</llo_original>
